<compile_context>
chip_gen: v7x
topology: tpu7x:2x2x1
jax: 0.10.0
libtpu: 0.0.40
codegen_flags: <defaults>
</compile_context>

<pallas_src>
import jax
import jax.numpy as jnp
import numpy as np
from jax.experimental import pallas as pl
from jax.experimental.pallas import tpu as pltpu

EPS = 1e-5
_N_CHUNKS = 8  # p1 * p2 * p3 = 2 * 2 * 2


def _patch_expand_ln_kernel(x_ref, w_ref, a_ref, mg_ref, b_ref, o_ref):
    # x_ref:  (tile_m, dim)     tokens (compute dtype)
    # w_ref:  (dim, 4*dim)      expand weight, stored already transposed
    # a_ref:  (4*dim, 8)        chunk-averaging matrix (1/c at chunk members)
    # mg_ref: (8, 4*dim)        one-hot chunk membership * tiled gamma
    # b_ref:  (1, 4*dim)        beta tiled 8x along channels
    # o_ref:  (tile_m, 4*dim)
    y = jnp.dot(x_ref[...], w_ref[...], preferred_element_type=jnp.float32)

    a = a_ref[...]
    # Per-chunk first/second moments via the MXU (stay lane-dense; no reshape,
    # XLU stays off the critical path).
    mean8 = jnp.dot(y, a, preferred_element_type=jnp.float32)      # (tile_m, 8)
    msq8 = jnp.dot(y * y, a, preferred_element_type=jnp.float32)   # (tile_m, 8)
    var8 = msq8 - mean8 * mean8
    inv8 = jax.lax.rsqrt(var8 + EPS)

    mg = mg_ref[...]
    # Broadcast back to full channel width with gamma already folded in.
    scale = jnp.dot(inv8, mg, preferred_element_type=jnp.float32)          # inv * gamma
    shift = jnp.dot(mean8 * inv8, mg, preferred_element_type=jnp.float32)  # mean * inv * gamma
    o_ref[...] = (y * scale - shift + b_ref[...]).astype(o_ref.dtype)


def _round_up(v, m):
    return (v + m - 1) // m * m


def _vmem_capacity_bytes():
    try:
        return int(pltpu.get_tpu_info().vmem_capacity_bytes)
    except Exception:
        return 64 << 20  # conservative fallback (v7x per-TensorCore VMEM)


def _compiler_params(**kwargs):
    cls = getattr(pltpu, "CompilerParams", None) or getattr(pltpu, "TPUCompilerParams")
    return cls(**kwargs)


def patch_expanding(x, w_expand, gamma, beta, *, tile_m=1024,
                    compute_dtype=None, out_dtype=None):
    """x: (B, H, W, D, dim) -> (B, 2H, 2W, 2D, dim // 2).

    w_expand is the nn.Linear(dim, 4*dim, bias=False) weight stored already
    transposed as (dim, 4*dim). gamma/beta are the LayerNorm(dim//2) params.
    Pass compute_dtype/out_dtype = jnp.bfloat16 when the surrounding model
    runs in bf16 (halves HBM traffic; accumulation stays f32).
    """
    B, H, W, D, dim = x.shape
    assert dim % 2 == 0
    c = dim // 2
    out_c = 4 * dim
    N = B * H * W * D

    compute_dtype = np.dtype(compute_dtype if compute_dtype is not None else x.dtype)
    out_dtype = np.dtype(out_dtype if out_dtype is not None else compute_dtype)
    in_itemsize = compute_dtype.itemsize
    out_itemsize = out_dtype.itemsize

    # ---- generation-aware VMEM budget --------------------------------------
    cap = _vmem_capacity_bytes()           # 128 MiB (v5e/v6e) / 64 MiB per-TC (v7x)
    vmem_cap = int(cap * 0.82)             # headroom for Mosaic internal scratch
    budget = int(vmem_cap / 1.35)          # tile-search budget (<= cap with slack)

    def est_vmem(tm):
        in_b = tm * dim * in_itemsize * 2                   # double-buffered input
        w_b = dim * out_c * in_itemsize * 2                 # weight (2 bufs today)
        out_b = tm * out_c * out_itemsize * 2               # double-buffered output
        small_b = (out_c * _N_CHUNKS * 2 + out_c) * 4 * 2   # A / Mg / beta
        tmp_b = 4 * tm * out_c * 4                          # live f32 temporaries
        return in_b + w_b + out_b + small_b + tmp_b

    # ---- tile size ----------------------------------------------------------
    sub = 16 if in_itemsize == 2 else 8      # sublane packing granularity
    tm = max(sub, min(_round_up(tile_m, sub), _round_up(N, sub)))
    if N > sub:                              # keep >= 2 grid steps (2-TC chips)
        tm = min(tm, _round_up(-(-N // 2), sub))
    while est_vmem(tm) > budget and tm > sub:
        if tm > 256:
            tm = max(256, tm - 256)          # shrink in 256s down to 256 ...
        else:
            nxt = max(sub, _round_up(tm // 2, sub))   # ... then halve to the floor
            if nxt == tm:
                break
            tm = nxt

    vmem_limit = int(min(vmem_cap, max(32 << 20, est_vmem(tm) * 1.35 + (2 << 20))))

    # ---- kernel operands ----------------------------------------------------
    x2 = x.reshape(N, dim).astype(compute_dtype)
    w = w_expand.astype(compute_dtype)

    chunk_id = np.arange(out_c) // c
    A = (chunk_id[:, None] == np.arange(_N_CHUNKS)[None, :]).astype(np.float32) / c
    Mhot = (np.arange(_N_CHUNKS)[:, None] == chunk_id[None, :]).astype(np.float32)
    g_full = jnp.tile(gamma.reshape(1, c).astype(jnp.float32), (1, _N_CHUNKS))
    b_full = jnp.tile(beta.reshape(1, c).astype(jnp.float32), (1, _N_CHUNKS))
    Mg = jnp.asarray(Mhot) * g_full          # gamma folded into broadcast-back

    grid = (pl.cdiv(N, tm),)                 # ragged last block: no pad / slice
    y = pl.pallas_call(
        _patch_expand_ln_kernel,
        out_shape=jax.ShapeDtypeStruct((N, out_c), out_dtype),
        grid_spec=pltpu.PrefetchScalarGridSpec(
            num_scalar_prefetch=0,
            grid=grid,
            in_specs=[
                pl.BlockSpec((tm, dim), lambda i: (i, 0)),
                pl.BlockSpec((dim, out_c), lambda i: (0, 0)),
                pl.BlockSpec((out_c, _N_CHUNKS), lambda i: (0, 0)),
                pl.BlockSpec((_N_CHUNKS, out_c), lambda i: (0, 0)),
                pl.BlockSpec((1, out_c), lambda i: (0, 0)),
            ],
            out_specs=pl.BlockSpec((tm, out_c), lambda i: (i, 0)),
        ),
        compiler_params=_compiler_params(
            dimension_semantics=("parallel",),
            vmem_limit_bytes=vmem_limit,
        ),
    )(x2, w, jnp.asarray(A), Mg, b_full)

    # XLA glue: 'b h w d (p1 p2 p3 c) -> b (h p1) (w p2) (d p3) c'
    # (see TODO(synk) at the top about fusing this into the output BlockSpec).
    y = y.reshape(B, H, W, D, 2, 2, 2, c)
    y = jnp.transpose(y, (0, 1, 4, 2, 5, 3, 6, 7))
    return y.reshape(B, 2 * H, 2 * W, 2 * D, c)


def reference(x, w_expand, gamma, beta):
    """Pure-JAX f32 reference matching the PyTorch forward exactly."""
    B, H, W, D, dim = x.shape
    c = dim // 2
    y = jnp.einsum("bhwdk,kn->bhwdn", x.astype(jnp.float32),
                   w_expand.astype(jnp.float32))
    y = y.reshape(B, H, W, D, 2, 2, 2, c)
    y = jnp.transpose(y, (0, 1, 4, 2, 5, 3, 6, 7)).reshape(B, 2 * H, 2 * W, 2 * D, c)
    mean = jnp.mean(y, axis=-1, keepdims=True)
    var = jnp.mean((y - mean) ** 2, axis=-1, keepdims=True)
    y = (y - mean) / jnp.sqrt(var + EPS)
    return y * gamma.astype(jnp.float32) + beta.astype(jnp.float32)


if __name__ == "__main__":
    key = jax.random.PRNGKey(0)

    # --- Test 1: float32 path, small shapes, exercises the ragged last block.
    B, H, W, D, dim = 2, 3, 4, 5, 16          # N = 120 tokens, not a tile multiple
    c = dim // 2
    k1, k2, k3, k4, k5 = jax.random.split(key, 5)
    x = jax.random.normal(k1, (B, H, W, D, dim), dtype=jnp.float32)
    w_expand = jax.random.normal(k2, (dim, 4 * dim), dtype=jnp.float32) * 0.1
    gamma = 1.0 + 0.1 * jax.random.normal(k3, (c,), dtype=jnp.float32)
    beta = 0.1 * jax.random.normal(k4, (c,), dtype=jnp.float32)

    out = jax.block_until_ready(patch_expanding(x, w_expand, gamma, beta))
    ref = jax.block_until_ready(reference(x, w_expand, gamma, beta))
    # Loose-ish tolerance: MXU default precision may round f32 operands of the
    # matmul-based statistics (see perf-review correctness note).
    np.testing.assert_allclose(np.asarray(out), np.asarray(ref),
                               rtol=3e-2, atol=3e-2)
    assert out.shape == (B, 2 * H, 2 * W, 2 * D, c)

    # --- Test 2: bf16 compute + bf16 output fast path (lane-dense 128-wide out).
    B2, H2, W2, D2, dim2 = 1, 2, 2, 4, 32
    c2 = dim2 // 2
    x2 = jax.random.normal(k5, (B2, H2, W2, D2, dim2), dtype=jnp.float32)
    w2 = jax.random.normal(k2, (dim2, 4 * dim2), dtype=jnp.float32) * 0.1
    gamma2 = 1.0 + 0.1 * jax.random.normal(k3, (c2,), dtype=jnp.float32)
    beta2 = 0.1 * jax.random.normal(k4, (c2,), dtype=jnp.float32)

    out2 = jax.block_until_ready(
        patch_expanding(x2, w2, gamma2, beta2,
                        compute_dtype=jnp.bfloat16, out_dtype=jnp.bfloat16))
    ref2 = jax.block_until_ready(reference(x2, w2, gamma2, beta2))
    np.testing.assert_allclose(np.asarray(out2, dtype=np.float32),
                               np.asarray(ref2), rtol=7e-2, atol=7e-2)
    assert out2.shape == (B2, 2 * H2, 2 * W2, 2 * D2, c2)
    assert out2.dtype == jnp.bfloat16

    print("KERNEL_OK")
</pallas_src>

<mosaic_0001>
module attributes {stable_mosaic.version = 11 : i64} {
  func.func @_patch_expand_ln_kernel(%arg0: i32, %arg1: memref<64x16xf32, #tpu.memory_space<vmem>>, %arg2: memref<16x64xf32, #tpu.memory_space<vmem>>, %arg3: memref<64x8xf32, #tpu.memory_space<vmem>>, %arg4: memref<8x64xf32, #tpu.memory_space<vmem>>, %arg5: memref<1x64xf32, #tpu.memory_space<vmem>>, %arg6: memref<64x64xf32, #tpu.memory_space<vmem>>) attributes {dimension_semantics = [#tpu.dimension_semantics<parallel>], iteration_bounds = array<i64: 2>, scalar_prefetch = 0 : i64, scratch_operands = 0 : i64, tpu.core_type = #tpu.core_type<tc>, window_params = [{transform_indices = @transform_0, window_bounds = array<i64: 64, 16>}, {pipeline_mode = #tpu.pipeline_mode<synchronous>, transform_indices = @transform_1, window_bounds = array<i64: 16, 64>}, {pipeline_mode = #tpu.pipeline_mode<synchronous>, transform_indices = @transform_2, window_bounds = array<i64: 64, 8>}, {pipeline_mode = #tpu.pipeline_mode<synchronous>, transform_indices = @transform_3, window_bounds = array<i64: 8, 64>}, {pipeline_mode = #tpu.pipeline_mode<synchronous>, transform_indices = @transform_4, window_bounds = array<i64: 1, 64>}, {transform_indices = @transform_5, window_bounds = array<i64: 64, 64>}]} {
    %c0 = arith.constant 0 : index
    %c0_0 = arith.constant 0 : index
    %0 = vector.load %arg1[%c0, %c0_0] : memref<64x16xf32, #tpu.memory_space<vmem>>, vector<64x16xf32>
    %c0_1 = arith.constant 0 : index
    %c0_2 = arith.constant 0 : index
    %1 = vector.load %arg2[%c0_1, %c0_2] : memref<16x64xf32, #tpu.memory_space<vmem>>, vector<16x64xf32>
    %cst = arith.constant dense<0.000000e+00> : vector<64x64xf32>
    %2 = tpu.matmul %0, %1, %cst {dimension_numbers = #tpu.dot_dimension_numbers<[1], [0], [0], [1], [0, 0, 1, 1], [], []>} : vector<64x16xf32>, vector<16x64xf32>, vector<64x64xf32> -> vector<64x64xf32>
    %c0_3 = arith.constant 0 : index
    %c0_4 = arith.constant 0 : index
    %3 = vector.load %arg3[%c0_3, %c0_4] : memref<64x8xf32, #tpu.memory_space<vmem>>, vector<64x8xf32>
    %cst_5 = arith.constant dense<0.000000e+00> : vector<64x8xf32>
    %4 = tpu.matmul %2, %3, %cst_5 {dimension_numbers = #tpu.dot_dimension_numbers<[1], [0], [0], [1], [0, 0, 1, 1], [], []>} : vector<64x64xf32>, vector<64x8xf32>, vector<64x8xf32> -> vector<64x8xf32>
    %5 = arith.mulf %2, %2 : vector<64x64xf32>
    %cst_6 = arith.constant dense<0.000000e+00> : vector<64x8xf32>
    %6 = tpu.matmul %5, %3, %cst_6 {dimension_numbers = #tpu.dot_dimension_numbers<[1], [0], [0], [1], [0, 0, 1, 1], [], []>} : vector<64x64xf32>, vector<64x8xf32>, vector<64x8xf32> -> vector<64x8xf32>
    %7 = arith.mulf %4, %4 : vector<64x8xf32>
    %8 = arith.subf %6, %7 : vector<64x8xf32>
    %cst_7 = arith.constant 9.99999974E-6 : f32
    %9 = vector.broadcast %cst_7 : f32 to vector<64x8xf32>
    %10 = arith.addf %8, %9 : vector<64x8xf32>
    %11 = math.rsqrt %10 : vector<64x8xf32>
    %c0_8 = arith.constant 0 : index
    %c0_9 = arith.constant 0 : index
    %12 = vector.load %arg4[%c0_8, %c0_9] : memref<8x64xf32, #tpu.memory_space<vmem>>, vector<8x64xf32>
    %cst_10 = arith.constant dense<0.000000e+00> : vector<64x64xf32>
    %13 = tpu.matmul %11, %12, %cst_10 {dimension_numbers = #tpu.dot_dimension_numbers<[1], [0], [0], [1], [0, 0, 1, 1], [], []>} : vector<64x8xf32>, vector<8x64xf32>, vector<64x64xf32> -> vector<64x64xf32>
    %14 = arith.mulf %4, %11 : vector<64x8xf32>
    %cst_11 = arith.constant dense<0.000000e+00> : vector<64x64xf32>
    %15 = tpu.matmul %14, %12, %cst_11 {dimension_numbers = #tpu.dot_dimension_numbers<[1], [0], [0], [1], [0, 0, 1, 1], [], []>} : vector<64x8xf32>, vector<8x64xf32>, vector<64x64xf32> -> vector<64x64xf32>
    %16 = arith.mulf %2, %13 : vector<64x64xf32>
    %17 = arith.subf %16, %15 : vector<64x64xf32>
    %c0_12 = arith.constant 0 : index
    %c0_13 = arith.constant 0 : index
    %18 = vector.load %arg5[%c0_12, %c0_13] : memref<1x64xf32, #tpu.memory_space<vmem>>, vector<1x64xf32>
    %19 = vector.broadcast %18 : vector<1x64xf32> to vector<64x64xf32>
    %20 = arith.addf %17, %19 : vector<64x64xf32>
    %c0_14 = arith.constant 0 : index
    %c0_15 = arith.constant 0 : index
    %21 = vector.load %arg6[%c0_14, %c0_15] : memref<64x64xf32, #tpu.memory_space<vmem>>, vector<64x64xf32>
    tpu.vector_store %arg6[%c0_14, %c0_15], %20 {strides = array<i32>} : memref<64x64xf32, #tpu.memory_space<vmem>>, vector<64x64xf32>,
    return
  }
  func.func @transform_0(%arg0: i32) -> (i32, i32) {
    %c0_i32 = arith.constant 0 : i32
    %c0_i32_0 = arith.constant 0 : i32
    return %arg0, %c0_i32 : i32, i32
  }
  func.func @transform_1(%arg0: i32) -> (i32, i32) {
    %c0_i32 = arith.constant 0 : i32
    %c0_i32_0 = arith.constant 0 : i32
    %c0_i32_1 = arith.constant 0 : i32
    return %c0_i32, %c0_i32_0 : i32, i32
  }
  func.func @transform_2(%arg0: i32) -> (i32, i32) {
    %c0_i32 = arith.constant 0 : i32
    %c0_i32_0 = arith.constant 0 : i32
    %c0_i32_1 = arith.constant 0 : i32
    return %c0_i32, %c0_i32_0 : i32, i32
  }
  func.func @transform_3(%arg0: i32) -> (i32, i32) {
    %c0_i32 = arith.constant 0 : i32
    %c0_i32_0 = arith.constant 0 : i32
    %c0_i32_1 = arith.constant 0 : i32
    return %c0_i32, %c0_i32_0 : i32, i32
  }
  func.func @transform_4(%arg0: i32) -> (i32, i32) {
    %c0_i32 = arith.constant 0 : i32
    %c0_i32_0 = arith.constant 0 : i32
    %c0_i32_1 = arith.constant 0 : i32
    return %c0_i32, %c0_i32_0 : i32, i32
  }
  func.func @transform_5(%arg0: i32) -> (i32, i32) {
    %c0_i32 = arith.constant 0 : i32
    %c0_i32_0 = arith.constant 0 : i32
    return %arg0, %c0_i32 : i32, i32
  }
}

</mosaic_0001>

<llo_original>
// kernel: tpu_custom_call.1
$region0: #{tpu_custom_call.1}
  #allocation0 [shape = 'u32[]', space=smem, size = 0x4, offset = 0x4, fixed_abs, tag = 'smem constant byte address 0x4 - core index']
  #allocation1 [shape = 'u32[144,128]{1,0:T(1,128)}', space=vmem, size = 0x12000, scoped, tag = 'internal scratch']
  %s0 = inlined_call_operand.vmem [shape: f32[120,16], index: 0, kind: input, shape index: {}]
  %s1 = inlined_call_operand.vmem [shape: f32[16,64], index: 1, kind: input, shape index: {}]
  %s2 = inlined_call_operand.vmem [shape: f32[64,8], index: 2, kind: input, shape index: {}]
  %s3 = inlined_call_operand.vmem [shape: f32[8,64], index: 3, kind: input, shape index: {}]
  %s4 = inlined_call_operand.vmem [shape: f32[1,64], index: 4, kind: input, shape index: {}]
  %s5 = inlined_call_operand.vmem [shape: f32[120,64], index: 5, kind: output, shape index: {}]
  %s6 = sld [smem:[#allocation0]]
  $region101: #{tpu_custom_call.1} parent=0
    _
  %s8 = ssub.s32 1, %s6
  %s9 = scalar_select 0, %s8, %s6
  $region1: #{tpu_custom_call.1} parent=0
    #allocation2 [shape = 'u8[65536]{0}', space=vmem, size = 0x10000, scoped, tag = 'output window, operand 0']
    loop: start=0, step=1, limit=4
    $region2: #{tpu_custom_call.1} parent=1 // loop_pre_header
      _
    $region3: #{tpu_custom_call.1} parent=1 // loop_header
      %s11 = sphi 0, %s15
      %p12 = scmp.ge.s32.totalorder %s11, 4
      %s21 = sphi 0, %s23
      %s24 = sphi 0, %s21
      %s25 = sphi 0, %s24
      %s41 = sphi 0, %s25
      %s45 = sphi 0, %s45
      %s47 = sphi 0, %s45
      %s48 = sphi 0, %s47
      %s62 = sphi 0, %s48
      %s66 = sphi 0, %s66
      %s68 = sphi 0, %s66
      %s69 = sphi 0, %s68
      %s83 = sphi 0, %s69
      %s87 = sphi 0, %s87
      %s89 = sphi 0, %s87
      %s90 = sphi 0, %s89
      %s104 = sphi 0, %s90
      %s108 = sphi 0, %s108
      %s110 = sphi 0, %s108
      %s111 = sphi 0, %s110
      %s125 = sphi 0, %s111
      %s131 = sphi 0, %s133
      %s134 = sphi 0, %s131
      %s135 = sphi 0, %s134
      %s151 = sphi 0, %s135
    $region4: #{tpu_custom_call.1} parent=1 // loop_header_branch
      %14 = sbr.rel (%p12) target = $region8
    $region5: #{tpu_custom_call.1} parent=1 // loop_body
      %s16 = ssub.s32 %s11, 1
      %s17 = ssub.s32 %s11, 2
      %s18 = sadd.s32 %s11, 1
      %s19 = ssub.s32 %s11, %s18
      %p20 = scmp.eq.s32.totalorder %s19, 0
      %s22 = sadd.s32 %s21, 1
      %s23 = scalar_select %p20, %s21, %s22
      %p26 = pneg %p20
      %p27 = scmp.eq.s32.totalorder %s11, 1
      %p28 = por %p26, %p27
      %p29 = scmp.ne.s32.totalorder %s21, %s24
      %p30 = scmp.eq.s32.totalorder %s11, 0
      %p31 = por %p29, %p30
      %p32 = scmp.ne.s32.totalorder %s21, %s24
      %p33 = scmp.eq.s32.totalorder %s16, 1
      %p34 = por %p32, %p33
      %p35 = scmp.ne.s32.totalorder %s24, %s25
      %p36 = scmp.eq.s32.totalorder %s16, 0
      %p37 = por %p35, %p36
      %p38 = scmp.ne.s32.totalorder %s24, %s25
      %p39 = scmp.eq.s32.totalorder %s17, 1
      %p40 = por %p38, %p39
      %p42 = scmp.ne.s32.totalorder %s25, %s41
      %p43 = scmp.eq.s32.totalorder %s17, 0
      %p44 = por %p42, %p43
      %s46 = sadd.s32 %s45, 1
      %p49 = scmp.eq.s32.totalorder %s11, 1
      %p50 = scmp.ne.s32.totalorder %s45, %s47
      %p51 = scmp.eq.s32.totalorder %s11, 0
      %p52 = por %p50, %p51
      %p53 = scmp.ne.s32.totalorder %s45, %s47
      %p54 = scmp.eq.s32.totalorder %s16, 1
      %p55 = por %p53, %p54
      %p56 = scmp.ne.s32.totalorder %s47, %s48
      %p57 = scmp.eq.s32.totalorder %s16, 0
      %p58 = por %p56, %p57
      %p59 = scmp.ne.s32.totalorder %s47, %s48
      %p60 = scmp.eq.s32.totalorder %s17, 1
      %p61 = por %p59, %p60
      %p63 = scmp.ne.s32.totalorder %s48, %s62
      %p64 = scmp.eq.s32.totalorder %s17, 0
      %p65 = por %p63, %p64
      %s67 = sadd.s32 %s66, 1
      %p70 = scmp.eq.s32.totalorder %s11, 1
      %p71 = scmp.ne.s32.totalorder %s66, %s68
      %p72 = scmp.eq.s32.totalorder %s11, 0
      %p73 = por %p71, %p72
      %p74 = scmp.ne.s32.totalorder %s66, %s68
      %p75 = scmp.eq.s32.totalorder %s16, 1
      %p76 = por %p74, %p75
      %p77 = scmp.ne.s32.totalorder %s68, %s69
      %p78 = scmp.eq.s32.totalorder %s16, 0
      %p79 = por %p77, %p78
      %p80 = scmp.ne.s32.totalorder %s68, %s69
      %p81 = scmp.eq.s32.totalorder %s17, 1
      %p82 = por %p80, %p81
      %p84 = scmp.ne.s32.totalorder %s69, %s83
      %p85 = scmp.eq.s32.totalorder %s17, 0
      %p86 = por %p84, %p85
      %s88 = sadd.s32 %s87, 1
      %p91 = scmp.eq.s32.totalorder %s11, 1
      %p92 = scmp.ne.s32.totalorder %s87, %s89
      %p93 = scmp.eq.s32.totalorder %s11, 0
      %p94 = por %p92, %p93
      %p95 = scmp.ne.s32.totalorder %s87, %s89
      %p96 = scmp.eq.s32.totalorder %s16, 1
      %p97 = por %p95, %p96
      %p98 = scmp.ne.s32.totalorder %s89, %s90
      %p99 = scmp.eq.s32.totalorder %s16, 0
      %p100 = por %p98, %p99
      %p101 = scmp.ne.s32.totalorder %s89, %s90
      %p102 = scmp.eq.s32.totalorder %s17, 1
      %p103 = por %p101, %p102
      %p105 = scmp.ne.s32.totalorder %s90, %s104
      %p106 = scmp.eq.s32.totalorder %s17, 0
      %p107 = por %p105, %p106
      %s109 = sadd.s32 %s108, 1
      %p112 = scmp.eq.s32.totalorder %s11, 1
      %p113 = scmp.ne.s32.totalorder %s108, %s110
      %p114 = scmp.eq.s32.totalorder %s11, 0
      %p115 = por %p113, %p114
      %p116 = scmp.ne.s32.totalorder %s108, %s110
      %p117 = scmp.eq.s32.totalorder %s16, 1
      %p118 = por %p116, %p117
      %p119 = scmp.ne.s32.totalorder %s110, %s111
      %p120 = scmp.eq.s32.totalorder %s16, 0
      %p121 = por %p119, %p120
      %p122 = scmp.ne.s32.totalorder %s110, %s111
      %p123 = scmp.eq.s32.totalorder %s17, 1
      %p124 = por %p122, %p123
      %p126 = scmp.ne.s32.totalorder %s111, %s125
      %p127 = scmp.eq.s32.totalorder %s17, 0
      %p128 = por %p126, %p127
      %s129 = ssub.s32 %s11, %s18
      %p130 = scmp.eq.s32.totalorder %s129, 0
      %s132 = sadd.s32 %s131, 1
      %s133 = scalar_select %p130, %s131, %s132
      %p136 = pneg %p130
      %p137 = scmp.eq.s32.totalorder %s11, 1
      %p138 = por %p136, %p137
      %p139 = scmp.ne.s32.totalorder %s131, %s134
      %p140 = scmp.eq.s32.totalorder %s11, 0
      %p141 = por %p139, %p140
      %p142 = scmp.ne.s32.totalorder %s131, %s134
      %p143 = scmp.eq.s32.totalorder %s16, 1
      %p144 = por %p142, %p143
      %p145 = scmp.ne.s32.totalorder %s134, %s135
      %p146 = scmp.eq.s32.totalorder %s16, 0
      %p147 = por %p145, %p146
      %p148 = scmp.ne.s32.totalorder %s134, %s135
      %p149 = scmp.eq.s32.totalorder %s17, 1
      %p150 = por %p148, %p149
      %p152 = scmp.ne.s32.totalorder %s135, %s151
      %p153 = scmp.eq.s32.totalorder %s17, 0
      %p154 = por %p152, %p153
      %p155 = scmp.le.s32.totalorder 1, %s11
      %p156 = scmp.lt.s32.totalorder %s11, 3
      %p157 = pnand %p155, %p156
      %p158 = pneg %p157
      // Predicated region
      $region9: #{tpu_custom_call.1} parent=5 // pred_check
        _
      $region10: #{tpu_custom_call.1} parent=5 // pred_check_branch
        %160 = sbr.rel (%p157) target = $region12
      $region11: #{tpu_custom_call.1} parent=5 // pred_region
        %s161 = ssub.s32 %s11, 1
        // Predicated region
        $region13: #{tpu_custom_call.1} parent=11 // pred_check
          %p162 = pneg %p58
        $region14: #{tpu_custom_call.1} parent=11 // pred_check_branch
          %164 = sbr.rel (%p162) target = $region16
        $region15: #{tpu_custom_call.1} parent=11 // pred_region
          _
        $region16: #{tpu_custom_call.1} parent=11 // pred_fallthru
          _
        // Predicated region
        $region17: #{tpu_custom_call.1} parent=11 // pred_check
          %p165 = pneg %p79
        $region18: #{tpu_custom_call.1} parent=11 // pred_check_branch
          %167 = sbr.rel (%p165) target = $region20
        $region19: #{tpu_custom_call.1} parent=11 // pred_region
          _
        $region20: #{tpu_custom_call.1} parent=11 // pred_fallthru
          _
        // Predicated region
        $region21: #{tpu_custom_call.1} parent=11 // pred_check
          %p168 = pneg %p100
        $region22: #{tpu_custom_call.1} parent=11 // pred_check_branch
          %170 = sbr.rel (%p168) target = $region24
        $region23: #{tpu_custom_call.1} parent=11 // pred_region
          _
        $region24: #{tpu_custom_call.1} parent=11 // pred_fallthru
          _
        // Predicated region
        $region25: #{tpu_custom_call.1} parent=11 // pred_check
          %p171 = pneg %p121
        $region26: #{tpu_custom_call.1} parent=11 // pred_check_branch
          %173 = sbr.rel (%p171) target = $region28
        $region27: #{tpu_custom_call.1} parent=11 // pred_region
          _
        $region28: #{tpu_custom_call.1} parent=11 // pred_fallthru
          _
      $region12: #{tpu_custom_call.1} parent=5 // pred_fallthru
        _
      %p174 = scmp.lt.s32.totalorder %s11, 2
      // Predicated region
      $region29: #{tpu_custom_call.1} parent=5 // pred_check
        %p175 = pneg %p174
      $region30: #{tpu_custom_call.1} parent=5 // pred_check_branch
        %177 = sbr.rel (%p175) target = $region32
      $region31: #{tpu_custom_call.1} parent=5 // pred_region
        // Predicated region
        $region33: #{tpu_custom_call.1} parent=31 // pred_check
          %p178 = pneg %p31
        $region34: #{tpu_custom_call.1} parent=31 // pred_check_branch
          %180 = sbr.rel (%p178) target = $region36
        $region35: #{tpu_custom_call.1} parent=31 // pred_region
          %s181 = smul.u32 8, %s11
          %s182 = ssub.s32 15, %s181
          %p183 = scmp.lt.s32.totalorder %s182, 8
          %s184 = scalar_select %p183, %s182, 8
          %s185 = smul.u32 128, %s184
          %p186 = scmp.lt.s32.totalorder %s181, 14
          %s187 = scalar_select %p186, %s181, 14
          %s188 = smul.addr %s187, 8
          %s189 = scalar_lea.vmem %s0, %s188
          %s190 = smul.u32 8, %s11
          %s191 = ssub.s32 15, %s190
          %p192 = scmp.lt.s32.totalorder %s191, 8
          %s193 = scalar_select %p192, %s191, 8
          %s194 = smul.u32 128, %s193
        $region36: #{tpu_custom_call.1} parent=31 // pred_fallthru
          _
      $region32: #{tpu_custom_call.1} parent=5 // pred_fallthru
        _
      %p195 = scmp.le.s32.totalorder 1, %s11
      %p196 = scmp.lt.s32.totalorder %s11, 3
      %p197 = pnand %p195, %p196
      %p198 = pneg %p197
      // Predicated region
      $region37: #{tpu_custom_call.1} parent=5 // pred_check
        _
      $region38: #{tpu_custom_call.1} parent=5 // pred_check_branch
        %200 = sbr.rel (%p197) target = $region40
      $region39: #{tpu_custom_call.1} parent=5 // pred_region
        %s201 = ssub.s32 %s11, 1
        %s202 = smul.u32 8, %s16
        %s203 = ssub.s32 15, %s202
        %p204 = scmp.lt.s32.totalorder %s203, 8
        %s205 = scalar_select %p204, %s203, 8
        %s206 = smul.u32 128, %s205
        %p207 = scmp.lt.s32.totalorder %s202, 14
        %s208 = scalar_select %p207, %s202, 14
        %s209 = smul.addr %s208, 8
        %s210 = scalar_lea.vmem %s0, %s209
        %p211 = pneg %p37
        %p212 = pneg %p34
        %p213 = pneg %p58
        %p214 = pneg %p55
        %p215 = pneg %p79
        %p216 = pneg %p76
        %p217 = pneg %p100
        %p218 = pneg %p97
        %p219 = pneg %p121
        %p220 = pneg %p118
        %p221 = pneg %p147
        %p222 = pneg %p144
        %s223 = sand.u32 %s134, 1
        %s224 = sand.u32 %s134, 1
        %s225 = smul.addr %s224, 64
        %s226 = scalar_lea.vmem [#allocation2], %s225
        %s227 = smul.u32 8, %s16
        %s228 = ssub.s32 15, %s227
        %p229 = scmp.lt.s32.totalorder %s228, 8
        %s230 = scalar_select %p229, %s228, 8
        %s231 = smul.u32 128, %s230
        %p232 = scmp.lt.s32.totalorder %s227, 14
        %s233 = scalar_select %p232, %s227, 14
        %s234 = smul.addr %s233, 8
        %s235 = scalar_lea.vmem %s0, %s234
        %s236 = smul.u32 8, %s16
        %s237 = ssub.s32 15, %s236
        %p238 = scmp.lt.s32.totalorder %s237, 8
        %s239 = scalar_select %p238, %s237, 8
        %s240 = smul.u32 128, %s239
        %s241 = smul.u32 8, %s16
        %s242 = ssub.s32 15, %s241
        %p243 = scmp.lt.s32.totalorder %s242, 8
        %s244 = scalar_select %p243, %s242, 8
        %s245 = smul.u32 128, %s244
        %v246 = vld [vmem:[%s235] sm:$0xff]
        %v247 = vld [vmem:[%s235 + $0x8] sm:$0xff]
        %v248 = vld [vmem:[%s235 + $0x10] sm:$0xff]
        %v249 = vld [vmem:[%s235 + $0x18] sm:$0xff]
        %v250 = vld [vmem:[%s235 + $0x20] sm:$0xff]
        %v251 = vld [vmem:[%s235 + $0x28] sm:$0xff]
        %v252 = vld [vmem:[%s235 + $0x30] sm:$0xff]
        %v253 = vld [vmem:[%s235 + $0x38] sm:$0xff]
        %v254 = vld [vmem:[%s1] sm:$0xff]
        %v255 = vld [vmem:[%s1 + $0x8] sm:$0xff]
        %vm256 = vcmask 130048
        %v258 = vsel %vm256, %v246, 0
        %v261 = vsel %vm256, %v247, 0
        %v264 = vsel %vm256, %v248, 0
        %v267 = vsel %vm256, %v249, 0
        %v270 = vsel %vm256, %v250, 0
        %v273 = vsel %vm256, %v251, 0
        %v276 = vsel %vm256, %v252, 0
        %v279 = vsel %vm256, %v253, 0
        %281 = vmatprep.subr.mxu0 0.0
        %282 = vmatpush1.msra.mxu0 %v254
        %283 = vmatprep.subr.mxu0 0.0
        %284 = vmatpush1.msra.mxu0 %v255
        %285 = vmatprep.subr.mxu0 0.0
        %286 = vmatpush1.msra.mxu0 0.0
        %287 = vmatprep.subr.mxu0 0.0
        %288 = vmatpush1.msra.mxu0 0.0
        %289 = vmatprep.subr.mxu0 0.0
        %290 = vmatpush1.msra.mxu0 0.0
        %291 = vmatprep.subr.mxu0 0.0
        %292 = vmatpush1.msra.mxu0 0.0
        %293 = vmatprep.subr.mxu0 0.0
        %294 = vmatpush1.msra.mxu0 0.0
        %295 = vmatprep.subr.mxu0 0.0
        %296 = vmatpush1.msra.mxu0 0.0
        %297 = vmatprep.subr.mxu0 0.0
        %298 = vmatpush1.msra.mxu0 0.0
        %299 = vmatprep.subr.mxu0 0.0
        %300 = vmatpush1.msra.mxu0 0.0
        %301 = vmatprep.subr.mxu0 0.0
        %302 = vmatpush1.msra.mxu0 0.0
        %303 = vmatprep.subr.mxu0 0.0
        %304 = vmatpush1.msra.mxu0 0.0
        %305 = vmatprep.subr.mxu0 0.0
        %306 = vmatpush1.msra.mxu0 0.0
        %307 = vmatprep.subr.mxu0 0.0
        %308 = vmatpush1.msra.mxu0 0.0
        %309 = vmatprep.subr.mxu0 0.0
        %310 = vmatpush1.msra.mxu0 0.0
        %311 = vmatprep.subr.mxu0 0.0
        %312 = vmatpush1.msra.mxu0 0.0
        %313 = vmatprep.subr.mxu0 0.0
        %314 = vmatpush1.msra.mxu0 0.0
        %315 = vmatprep.subr.mxu0 0.0
        %316 = vmatpush1.msra.mxu0 0.0
        %317 = vmatprep.subr.mxu0 0.0
        %318 = vmatpush1.msra.mxu0 0.0
        %319 = vmatprep.subr.mxu0 0.0
        %320 = vmatpush1.msra.mxu0 0.0
        %321 = vmatprep.subr.mxu0 0.0
        %322 = vmatpush1.msra.mxu0 0.0
        %323 = vmatprep.subr.mxu0 0.0
        %324 = vmatpush1.msra.mxu0 0.0
        %325 = vmatprep.subr.mxu0 0.0
        %326 = vmatpush1.msra.mxu0 0.0
        %327 = vmatprep.subr.mxu0 0.0
        %328 = vmatpush1.msra.mxu0 0.0
        %329 = vmatprep.subr.mxu0 0.0
        %330 = vmatpush1.msra.mxu0 0.0
        %331 = vmatprep.subr.mxu0 0.0
        %332 = vmatpush1.msra.mxu0 0.0
        %333 = vmatprep.subr.mxu0 0.0
        %334 = vmatpush1.msra.mxu0 0.0
        %335 = vmatprep.subr.mxu0 0.0
        %336 = vmatpush1.msra.mxu0 0.0
        %337 = vmatprep.subr.mxu0 0.0
        %338 = vmatpush1.msra.mxu0 0.0
        %339 = vmatprep.subr.mxu0 0.0
        %340 = vmatpush1.msra.mxu0 0.0
        %341 = vmatprep.subr.mxu0 0.0
        %342 = vmatpush1.msra.mxu0 0.0
        %343 = vmatprep.subr.mxu0 0.0
        %344 = vmatpush1.msra.mxu0 0.0
        %345 = vmatprep.mubr.f32.mxu0 0.0
        %346 = vmatmul.mubr.f32.gmra.mrb[0].mxu0 %v258
        %v347 = vpop.f32.mrb[0].mxu0
        %v348 = vadd.f32 0.0, %v347
        %v349 = vpop.f32.mrb[0].mxu0
        %350 = vmatprep.mubr.f32.mxu0 0.0
        %351 = vmatmul.mubr.f32.gmra.mrb[0].mxu0 %v261
        %v352 = vpop.f32.mrb[0].mxu0
        %v353 = vadd.f32 0.0, %v352
        %v354 = vpop.f32.mrb[0].mxu0
        %355 = vmatprep.mubr.f32.mxu0 0.0
        %356 = vmatmul.mubr.f32.gmra.mrb[0].mxu0 %v264
        %v357 = vpop.f32.mrb[0].mxu0
        %v358 = vadd.f32 0.0, %v357
        %v359 = vpop.f32.mrb[0].mxu0
        %360 = vmatprep.mubr.f32.mxu0 0.0
        %361 = vmatmul.mubr.f32.gmra.mrb[0].mxu0 %v267
        %v362 = vpop.f32.mrb[0].mxu0
        %v363 = vadd.f32 0.0, %v362
        %v364 = vpop.f32.mrb[0].mxu0
        %365 = vmatprep.mubr.f32.mxu0 0.0
        %366 = vmatmul.mubr.f32.gmra.mrb[0].mxu0 %v270
        %v367 = vpop.f32.mrb[0].mxu0
        %v368 = vadd.f32 0.0, %v367
        %v369 = vpop.f32.mrb[0].mxu0
        %370 = vmatprep.mubr.f32.mxu0 0.0
        %371 = vmatmul.mubr.f32.gmra.mrb[0].mxu0 %v273
        %v372 = vpop.f32.mrb[0].mxu0
        %v373 = vadd.f32 0.0, %v372
        %v374 = vpop.f32.mrb[0].mxu0
        %375 = vmatprep.mubr.f32.mxu0 0.0
        %376 = vmatmul.mubr.f32.gmra.mrb[0].mxu0 %v276
        %v377 = vpop.f32.mrb[0].mxu0
        %v378 = vadd.f32 0.0, %v377
        %v379 = vpop.f32.mrb[0].mxu0
        %380 = vmatprep.mubr.f32.mxu0 0.0
        %381 = vmatmul.mubr.f32.gmra.mrb[0].mxu0 %v279
        %v382 = vpop.f32.mrb[0].mxu0
        %v383 = vadd.f32 0.0, %v382
        %v384 = vpop.f32.mrb[0].mxu0
        %385 = vdwg.mxu0
        %v386 = vld [vmem:[%s2] sm:$0xff]
        %v387 = vld [vmem:[%s2 + $0x8] sm:$0xff]
        %v388 = vld [vmem:[%s2 + $0x10] sm:$0xff]
        %v389 = vld [vmem:[%s2 + $0x18] sm:$0xff]
        %v390 = vld [vmem:[%s2 + $0x20] sm:$0xff]
        %v391 = vld [vmem:[%s2 + $0x28] sm:$0xff]
        %v392 = vld [vmem:[%s2 + $0x30] sm:$0xff]
        %v393 = vld [vmem:[%s2 + $0x38] sm:$0xff]
        %vm394 = vcmask 523264
        %v396 = vsel %vm394, %v348, 0
        %v399 = vsel %vm394, %v353, 0
        %v402 = vsel %vm394, %v358, 0
        %v405 = vsel %vm394, %v363, 0
        %v408 = vsel %vm394, %v368, 0
        %v411 = vsel %vm394, %v373, 0
        %v414 = vsel %vm394, %v378, 0
        %v417 = vsel %vm394, %v383, 0
        %419 = vmatprep.subr.mxu0 0.0
        %420 = vmatpush1.msra.mxu0 %v386
        %421 = vmatprep.subr.mxu0 0.0
        %422 = vmatpush1.msra.mxu0 %v387
        %423 = vmatprep.subr.mxu0 0.0
        %424 = vmatpush1.msra.mxu0 %v388
        %425 = vmatprep.subr.mxu0 0.0
        %426 = vmatpush1.msra.mxu0 %v389
        %427 = vmatprep.subr.mxu0 0.0
        %428 = vmatpush1.msra.mxu0 %v390
        %429 = vmatprep.subr.mxu0 0.0
        %430 = vmatpush1.msra.mxu0 %v391
        %431 = vmatprep.subr.mxu0 0.0
        %432 = vmatpush1.msra.mxu0 %v392
        %433 = vmatprep.subr.mxu0 0.0
        %434 = vmatpush1.msra.mxu0 %v393
        %435 = vmatprep.subr.mxu0 0.0
        %436 = vmatpush1.msra.mxu0 0.0
        %437 = vmatprep.subr.mxu0 0.0
        %438 = vmatpush1.msra.mxu0 0.0
        %439 = vmatprep.subr.mxu0 0.0
        %440 = vmatpush1.msra.mxu0 0.0
        %441 = vmatprep.subr.mxu0 0.0
        %442 = vmatpush1.msra.mxu0 0.0
        %443 = vmatprep.subr.mxu0 0.0
        %444 = vmatpush1.msra.mxu0 0.0
        %445 = vmatprep.subr.mxu0 0.0
        %446 = vmatpush1.msra.mxu0 0.0
        %447 = vmatprep.subr.mxu0 0.0
        %448 = vmatpush1.msra.mxu0 0.0
        %449 = vmatprep.subr.mxu0 0.0
        %450 = vmatpush1.msra.mxu0 0.0
        %451 = vmatprep.subr.mxu0 0.0
        %452 = vmatpush1.msra.mxu0 0.0
        %453 = vmatprep.subr.mxu0 0.0
        %454 = vmatpush1.msra.mxu0 0.0
        %455 = vmatprep.subr.mxu0 0.0
        %456 = vmatpush1.msra.mxu0 0.0
        %457 = vmatprep.subr.mxu0 0.0
        %458 = vmatpush1.msra.mxu0 0.0
        %459 = vmatprep.subr.mxu0 0.0
        %460 = vmatpush1.msra.mxu0 0.0
        %461 = vmatprep.subr.mxu0 0.0
        %462 = vmatpush1.msra.mxu0 0.0
        %463 = vmatprep.subr.mxu0 0.0
        %464 = vmatpush1.msra.mxu0 0.0
        %465 = vmatprep.subr.mxu0 0.0
        %466 = vmatpush1.msra.mxu0 0.0
        %467 = vmatprep.subr.mxu0 0.0
        %468 = vmatpush1.msra.mxu0 0.0
        %469 = vmatprep.subr.mxu0 0.0
        %470 = vmatpush1.msra.mxu0 0.0
        %471 = vmatprep.subr.mxu0 0.0
        %472 = vmatpush1.msra.mxu0 0.0
        %473 = vmatprep.subr.mxu0 0.0
        %474 = vmatpush1.msra.mxu0 0.0
        %475 = vmatprep.subr.mxu0 0.0
        %476 = vmatpush1.msra.mxu0 0.0
        %477 = vmatprep.subr.mxu0 0.0
        %478 = vmatpush1.msra.mxu0 0.0
        %479 = vmatprep.subr.mxu0 0.0
        %480 = vmatpush1.msra.mxu0 0.0
        %481 = vmatprep.subr.mxu0 0.0
        %482 = vmatpush1.msra.mxu0 0.0
        %483 = vmatprep.mubr.f32.mxu0 0.0
        %484 = vmatmul.mubr.f32.gmra.mrb[0].mxu0 %v396
        %v485 = vpop.f32.mrb[0].mxu0
        %v486 = vadd.f32 0.0, %v485
        %v487 = vpop.f32.mrb[0].mxu0
        %488 = vmatprep.mubr.f32.mxu0 0.0
        %489 = vmatmul.mubr.f32.gmra.mrb[0].mxu0 %v399
        %v490 = vpop.f32.mrb[0].mxu0
        %v491 = vadd.f32 0.0, %v490
        %v492 = vpop.f32.mrb[0].mxu0
        %493 = vmatprep.mubr.f32.mxu0 0.0
        %494 = vmatmul.mubr.f32.gmra.mrb[0].mxu0 %v402
        %v495 = vpop.f32.mrb[0].mxu0
        %v496 = vadd.f32 0.0, %v495
        %v497 = vpop.f32.mrb[0].mxu0
        %498 = vmatprep.mubr.f32.mxu0 0.0
        %499 = vmatmul.mubr.f32.gmra.mrb[0].mxu0 %v405
        %v500 = vpop.f32.mrb[0].mxu0
        %v501 = vadd.f32 0.0, %v500
        %v502 = vpop.f32.mrb[0].mxu0
        %503 = vmatprep.mubr.f32.mxu0 0.0
        %504 = vmatmul.mubr.f32.gmra.mrb[0].mxu0 %v408
        %v505 = vpop.f32.mrb[0].mxu0
        %v506 = vadd.f32 0.0, %v505
        %v507 = vpop.f32.mrb[0].mxu0
        %508 = vmatprep.mubr.f32.mxu0 0.0
        %509 = vmatmul.mubr.f32.gmra.mrb[0].mxu0 %v411
        %v510 = vpop.f32.mrb[0].mxu0
        %v511 = vadd.f32 0.0, %v510
        %v512 = vpop.f32.mrb[0].mxu0
        %513 = vmatprep.mubr.f32.mxu0 0.0
        %514 = vmatmul.mubr.f32.gmra.mrb[0].mxu0 %v414
        %v515 = vpop.f32.mrb[0].mxu0
        %v516 = vadd.f32 0.0, %v515
        %v517 = vpop.f32.mrb[0].mxu0
        %518 = vmatprep.mubr.f32.mxu0 0.0
        %519 = vmatmul.mubr.f32.gmra.mrb[0].mxu0 %v417
        %v520 = vpop.f32.mrb[0].mxu0
        %v521 = vadd.f32 0.0, %v520
        %v522 = vpop.f32.mrb[0].mxu0
        %523 = vdwg.mxu0
        %v524 = vmul.f32 %v348, %v348
        %v525 = vmul.f32 %v353, %v353
        %v526 = vmul.f32 %v358, %v358
        %v527 = vmul.f32 %v363, %v363
        %v528 = vmul.f32 %v368, %v368
        %v529 = vmul.f32 %v373, %v373
        %v530 = vmul.f32 %v378, %v378
        %v531 = vmul.f32 %v383, %v383
        %v533 = vsel %vm394, %v524, 0
        %v536 = vsel %vm394, %v525, 0
        %v539 = vsel %vm394, %v526, 0
        %v542 = vsel %vm394, %v527, 0
        %v545 = vsel %vm394, %v528, 0
        %v548 = vsel %vm394, %v529, 0
        %v551 = vsel %vm394, %v530, 0
        %v554 = vsel %vm394, %v531, 0
        %556 = vmatprep.subr.mxu0 0.0
        %557 = vmatpush1.msra.mxu0 %v386
        %558 = vmatprep.subr.mxu0 0.0
        %559 = vmatpush1.msra.mxu0 %v387
        %560 = vmatprep.subr.mxu0 0.0
        %561 = vmatpush1.msra.mxu0 %v388
        %562 = vmatprep.subr.mxu0 0.0
        %563 = vmatpush1.msra.mxu0 %v389
        %564 = vmatprep.subr.mxu0 0.0
        %565 = vmatpush1.msra.mxu0 %v390
        %566 = vmatprep.subr.mxu0 0.0
        %567 = vmatpush1.msra.mxu0 %v391
        %568 = vmatprep.subr.mxu0 0.0
        %569 = vmatpush1.msra.mxu0 %v392
        %570 = vmatprep.subr.mxu0 0.0
        %571 = vmatpush1.msra.mxu0 %v393
        %572 = vmatprep.subr.mxu0 0.0
        %573 = vmatpush1.msra.mxu0 0.0
        %574 = vmatprep.subr.mxu0 0.0
        %575 = vmatpush1.msra.mxu0 0.0
        %576 = vmatprep.subr.mxu0 0.0
        %577 = vmatpush1.msra.mxu0 0.0
        %578 = vmatprep.subr.mxu0 0.0
        %579 = vmatpush1.msra.mxu0 0.0
        %580 = vmatprep.subr.mxu0 0.0
        %581 = vmatpush1.msra.mxu0 0.0
        %582 = vmatprep.subr.mxu0 0.0
        %583 = vmatpush1.msra.mxu0 0.0
        %584 = vmatprep.subr.mxu0 0.0
        %585 = vmatpush1.msra.mxu0 0.0
        %586 = vmatprep.subr.mxu0 0.0
        %587 = vmatpush1.msra.mxu0 0.0
        %588 = vmatprep.subr.mxu0 0.0
        %589 = vmatpush1.msra.mxu0 0.0
        %590 = vmatprep.subr.mxu0 0.0
        %591 = vmatpush1.msra.mxu0 0.0
        %592 = vmatprep.subr.mxu0 0.0
        %593 = vmatpush1.msra.mxu0 0.0
        %594 = vmatprep.subr.mxu0 0.0
        %595 = vmatpush1.msra.mxu0 0.0
        %596 = vmatprep.subr.mxu0 0.0
        %597 = vmatpush1.msra.mxu0 0.0
        %598 = vmatprep.subr.mxu0 0.0
        %599 = vmatpush1.msra.mxu0 0.0
        %600 = vmatprep.subr.mxu0 0.0
        %601 = vmatpush1.msra.mxu0 0.0
        %602 = vmatprep.subr.mxu0 0.0
        %603 = vmatpush1.msra.mxu0 0.0
        %604 = vmatprep.subr.mxu0 0.0
        %605 = vmatpush1.msra.mxu0 0.0
        %606 = vmatprep.subr.mxu0 0.0
        %607 = vmatpush1.msra.mxu0 0.0
        %608 = vmatprep.subr.mxu0 0.0
        %609 = vmatpush1.msra.mxu0 0.0
        %610 = vmatprep.subr.mxu0 0.0
        %611 = vmatpush1.msra.mxu0 0.0
        %612 = vmatprep.subr.mxu0 0.0
        %613 = vmatpush1.msra.mxu0 0.0
        %614 = vmatprep.subr.mxu0 0.0
        %615 = vmatpush1.msra.mxu0 0.0
        %616 = vmatprep.subr.mxu0 0.0
        %617 = vmatpush1.msra.mxu0 0.0
        %618 = vmatprep.subr.mxu0 0.0
        %619 = vmatpush1.msra.mxu0 0.0
        %620 = vmatprep.mubr.f32.mxu0 0.0
        %621 = vmatmul.mubr.f32.gmra.mrb[0].mxu0 %v533
        %v622 = vpop.f32.mrb[0].mxu0
        %v623 = vadd.f32 0.0, %v622
        %v624 = vpop.f32.mrb[0].mxu0
        %625 = vmatprep.mubr.f32.mxu0 0.0
        %626 = vmatmul.mubr.f32.gmra.mrb[0].mxu0 %v536
        %v627 = vpop.f32.mrb[0].mxu0
        %v628 = vadd.f32 0.0, %v627
        %v629 = vpop.f32.mrb[0].mxu0
        %630 = vmatprep.mubr.f32.mxu0 0.0
        %631 = vmatmul.mubr.f32.gmra.mrb[0].mxu0 %v539
        %v632 = vpop.f32.mrb[0].mxu0
        %v633 = vadd.f32 0.0, %v632
        %v634 = vpop.f32.mrb[0].mxu0
        %635 = vmatprep.mubr.f32.mxu0 0.0
        %636 = vmatmul.mubr.f32.gmra.mrb[0].mxu0 %v542
        %v637 = vpop.f32.mrb[0].mxu0
        %v638 = vadd.f32 0.0, %v637
        %v639 = vpop.f32.mrb[0].mxu0
        %640 = vmatprep.mubr.f32.mxu0 0.0
        %641 = vmatmul.mubr.f32.gmra.mrb[0].mxu0 %v545
        %v642 = vpop.f32.mrb[0].mxu0
        %v643 = vadd.f32 0.0, %v642
        %v644 = vpop.f32.mrb[0].mxu0
        %645 = vmatprep.mubr.f32.mxu0 0.0
        %646 = vmatmul.mubr.f32.gmra.mrb[0].mxu0 %v548
        %v647 = vpop.f32.mrb[0].mxu0
        %v648 = vadd.f32 0.0, %v647
        %v649 = vpop.f32.mrb[0].mxu0
        %650 = vmatprep.mubr.f32.mxu0 0.0
        %651 = vmatmul.mubr.f32.gmra.mrb[0].mxu0 %v551
        %v652 = vpop.f32.mrb[0].mxu0
        %v653 = vadd.f32 0.0, %v652
        %v654 = vpop.f32.mrb[0].mxu0
        %655 = vmatprep.mubr.f32.mxu0 0.0
        %656 = vmatmul.mubr.f32.gmra.mrb[0].mxu0 %v554
        %v657 = vpop.f32.mrb[0].mxu0
        %v658 = vadd.f32 0.0, %v657
        %v659 = vpop.f32.mrb[0].mxu0
        %660 = vdwg.mxu0
        %v661 = vmul.f32 %v486, %v486
        %v662 = vmul.f32 %v491, %v491
        %v663 = vmul.f32 %v496, %v496
        %v664 = vmul.f32 %v501, %v501
        %v665 = vmul.f32 %v506, %v506
        %v666 = vmul.f32 %v511, %v511
        %v667 = vmul.f32 %v516, %v516
        %v668 = vmul.f32 %v521, %v521
        %v669 = vsub.f32 %v623, %v661
        %v670 = vsub.f32 %v628, %v662
        %v671 = vsub.f32 %v633, %v663
        %v672 = vsub.f32 %v638, %v664
        %v673 = vsub.f32 %v643, %v665
        %v674 = vsub.f32 %v648, %v666
        %v675 = vsub.f32 %v653, %v667
        %v676 = vsub.f32 %v658, %v668
        %v677 = vadd.f32 %v669, 1e-05
        %v678 = vadd.f32 %v670, 1e-05
        %v679 = vadd.f32 %v671, 1e-05
        %v680 = vadd.f32 %v672, 1e-05
        %v681 = vadd.f32 %v673, 1e-05
        %v682 = vadd.f32 %v674, 1e-05
        %v683 = vadd.f32 %v675, 1e-05
        %v684 = vadd.f32 %v676, 1e-05
        %v685 = vrsqrt.pop %v677
        %v686 = vrsqrt.pop %v678
        %v687 = vrsqrt.pop %v679
        %v688 = vrsqrt.pop %v680
        %v689 = vrsqrt.pop %v681
        %v690 = vrsqrt.pop %v682
        %v691 = vrsqrt.pop %v683
        %v692 = vrsqrt.pop %v684
        %v693 = vld [vmem:[%s3] sm:$0xff]
        %vm694 = vcmask 64512
        %v696 = vsel %vm694, %v685, 0
        %v699 = vsel %vm694, %v686, 0
        %v702 = vsel %vm694, %v687, 0
        %v705 = vsel %vm694, %v688, 0
        %v708 = vsel %vm694, %v689, 0
        %v711 = vsel %vm694, %v690, 0
        %v714 = vsel %vm694, %v691, 0
        %v717 = vsel %vm694, %v692, 0
        %719 = vmatprep.subr.mxu0 0.0
        %720 = vmatpush1.msra.mxu0 %v693
        %721 = vmatprep.subr.mxu0 0.0
        %722 = vmatpush1.msra.mxu0 0.0
        %723 = vmatprep.subr.mxu0 0.0
        %724 = vmatpush1.msra.mxu0 0.0
        %725 = vmatprep.subr.mxu0 0.0
        %726 = vmatpush1.msra.mxu0 0.0
        %727 = vmatprep.subr.mxu0 0.0
        %728 = vmatpush1.msra.mxu0 0.0
        %729 = vmatprep.subr.mxu0 0.0
        %730 = vmatpush1.msra.mxu0 0.0
        %731 = vmatprep.subr.mxu0 0.0
        %732 = vmatpush1.msra.mxu0 0.0
        %733 = vmatprep.subr.mxu0 0.0
        %734 = vmatpush1.msra.mxu0 0.0
        %735 = vmatprep.subr.mxu0 0.0
        %736 = vmatpush1.msra.mxu0 0.0
        %737 = vmatprep.subr.mxu0 0.0
        %738 = vmatpush1.msra.mxu0 0.0
        %739 = vmatprep.subr.mxu0 0.0
        %740 = vmatpush1.msra.mxu0 0.0
        %741 = vmatprep.subr.mxu0 0.0
        %742 = vmatpush1.msra.mxu0 0.0
        %743 = vmatprep.subr.mxu0 0.0
        %744 = vmatpush1.msra.mxu0 0.0
        %745 = vmatprep.subr.mxu0 0.0
        %746 = vmatpush1.msra.mxu0 0.0
        %747 = vmatprep.subr.mxu0 0.0
        %748 = vmatpush1.msra.mxu0 0.0
        %749 = vmatprep.subr.mxu0 0.0
        %750 = vmatpush1.msra.mxu0 0.0
        %751 = vmatprep.subr.mxu0 0.0
        %752 = vmatpush1.msra.mxu0 0.0
        %753 = vmatprep.subr.mxu0 0.0
        %754 = vmatpush1.msra.mxu0 0.0
        %755 = vmatprep.subr.mxu0 0.0
        %756 = vmatpush1.msra.mxu0 0.0
        %757 = vmatprep.subr.mxu0 0.0
        %758 = vmatpush1.msra.mxu0 0.0
        %759 = vmatprep.subr.mxu0 0.0
        %760 = vmatpush1.msra.mxu0 0.0
        %761 = vmatprep.subr.mxu0 0.0
        %762 = vmatpush1.msra.mxu0 0.0
        %763 = vmatprep.subr.mxu0 0.0
        %764 = vmatpush1.msra.mxu0 0.0
        %765 = vmatprep.subr.mxu0 0.0
        %766 = vmatpush1.msra.mxu0 0.0
        %767 = vmatprep.subr.mxu0 0.0
        %768 = vmatpush1.msra.mxu0 0.0
        %769 = vmatprep.subr.mxu0 0.0
        %770 = vmatpush1.msra.mxu0 0.0
        %771 = vmatprep.subr.mxu0 0.0
        %772 = vmatpush1.msra.mxu0 0.0
        %773 = vmatprep.subr.mxu0 0.0
        %774 = vmatpush1.msra.mxu0 0.0
        %775 = vmatprep.subr.mxu0 0.0
        %776 = vmatpush1.msra.mxu0 0.0
        %777 = vmatprep.subr.mxu0 0.0
        %778 = vmatpush1.msra.mxu0 0.0
        %779 = vmatprep.subr.mxu0 0.0
        %780 = vmatpush1.msra.mxu0 0.0
        %781 = vmatprep.subr.mxu0 0.0
        %782 = vmatpush1.msra.mxu0 0.0
        %783 = vmatprep.mubr.f32.mxu0 0.0
        %784 = vmatmul.mubr.f32.gmra.mrb[0].mxu0 %v696
        %v785 = vpop.f32.mrb[0].mxu0
        %v786 = vadd.f32 0.0, %v785
        %v787 = vpop.f32.mrb[0].mxu0
        %788 = vmatprep.mubr.f32.mxu0 0.0
        %789 = vmatmul.mubr.f32.gmra.mrb[0].mxu0 %v699
        %v790 = vpop.f32.mrb[0].mxu0
        %v791 = vadd.f32 0.0, %v790
        %v792 = vpop.f32.mrb[0].mxu0
        %793 = vmatprep.mubr.f32.mxu0 0.0
        %794 = vmatmul.mubr.f32.gmra.mrb[0].mxu0 %v702
        %v795 = vpop.f32.mrb[0].mxu0
        %v796 = vadd.f32 0.0, %v795
        %v797 = vpop.f32.mrb[0].mxu0
        %798 = vmatprep.mubr.f32.mxu0 0.0
        %799 = vmatmul.mubr.f32.gmra.mrb[0].mxu0 %v705
        %v800 = vpop.f32.mrb[0].mxu0
        %v801 = vadd.f32 0.0, %v800
        %v802 = vpop.f32.mrb[0].mxu0
        %803 = vmatprep.mubr.f32.mxu0 0.0
        %804 = vmatmul.mubr.f32.gmra.mrb[0].mxu0 %v708
        %v805 = vpop.f32.mrb[0].mxu0
        %v806 = vadd.f32 0.0, %v805
        %v807 = vpop.f32.mrb[0].mxu0
        %808 = vmatprep.mubr.f32.mxu0 0.0
        %809 = vmatmul.mubr.f32.gmra.mrb[0].mxu0 %v711
        %v810 = vpop.f32.mrb[0].mxu0
        %v811 = vadd.f32 0.0, %v810
        %v812 = vpop.f32.mrb[0].mxu0
        %813 = vmatprep.mubr.f32.mxu0 0.0
        %814 = vmatmul.mubr.f32.gmra.mrb[0].mxu0 %v714
        %v815 = vpop.f32.mrb[0].mxu0
        %v816 = vadd.f32 0.0, %v815
        %v817 = vpop.f32.mrb[0].mxu0
        %818 = vmatprep.mubr.f32.mxu0 0.0
        %819 = vmatmul.mubr.f32.gmra.mrb[0].mxu0 %v717
        %v820 = vpop.f32.mrb[0].mxu0
        %v821 = vadd.f32 0.0, %v820
        %v822 = vpop.f32.mrb[0].mxu0
        %823 = vdwg.mxu0
        %v824 = vmul.f32 %v486, %v685
        %v825 = vmul.f32 %v491, %v686
        %v826 = vmul.f32 %v496, %v687
        %v827 = vmul.f32 %v501, %v688
        %v828 = vmul.f32 %v506, %v689
        %v829 = vmul.f32 %v511, %v690
        %v830 = vmul.f32 %v516, %v691
        %v831 = vmul.f32 %v521, %v692
        %v833 = vsel %vm694, %v824, 0
        %v836 = vsel %vm694, %v825, 0
        %v839 = vsel %vm694, %v826, 0
        %v842 = vsel %vm694, %v827, 0
        %v845 = vsel %vm694, %v828, 0
        %v848 = vsel %vm694, %v829, 0
        %v851 = vsel %vm694, %v830, 0
        %v854 = vsel %vm694, %v831, 0
        %856 = vmatprep.subr.mxu0 0.0
        %857 = vmatpush1.msra.mxu0 %v693
        %858 = vmatprep.subr.mxu0 0.0
        %859 = vmatpush1.msra.mxu0 0.0
        %860 = vmatprep.subr.mxu0 0.0
        %861 = vmatpush1.msra.mxu0 0.0
        %862 = vmatprep.subr.mxu0 0.0
        %863 = vmatpush1.msra.mxu0 0.0
        %864 = vmatprep.subr.mxu0 0.0
        %865 = vmatpush1.msra.mxu0 0.0
        %866 = vmatprep.subr.mxu0 0.0
        %867 = vmatpush1.msra.mxu0 0.0
        %868 = vmatprep.subr.mxu0 0.0
        %869 = vmatpush1.msra.mxu0 0.0
        %870 = vmatprep.subr.mxu0 0.0
        %871 = vmatpush1.msra.mxu0 0.0
        %872 = vmatprep.subr.mxu0 0.0
        %873 = vmatpush1.msra.mxu0 0.0
        %874 = vmatprep.subr.mxu0 0.0
        %875 = vmatpush1.msra.mxu0 0.0
        %876 = vmatprep.subr.mxu0 0.0
        %877 = vmatpush1.msra.mxu0 0.0
        %878 = vmatprep.subr.mxu0 0.0
        %879 = vmatpush1.msra.mxu0 0.0
        %880 = vmatprep.subr.mxu0 0.0
        %881 = vmatpush1.msra.mxu0 0.0
        %882 = vmatprep.subr.mxu0 0.0
        %883 = vmatpush1.msra.mxu0 0.0
        %884 = vmatprep.subr.mxu0 0.0
        %885 = vmatpush1.msra.mxu0 0.0
        %886 = vmatprep.subr.mxu0 0.0
        %887 = vmatpush1.msra.mxu0 0.0
        %888 = vmatprep.subr.mxu0 0.0
        %889 = vmatpush1.msra.mxu0 0.0
        %890 = vmatprep.subr.mxu0 0.0
        %891 = vmatpush1.msra.mxu0 0.0
        %892 = vmatprep.subr.mxu0 0.0
        %893 = vmatpush1.msra.mxu0 0.0
        %894 = vmatprep.subr.mxu0 0.0
        %895 = vmatpush1.msra.mxu0 0.0
        %896 = vmatprep.subr.mxu0 0.0
        %897 = vmatpush1.msra.mxu0 0.0
        %898 = vmatprep.subr.mxu0 0.0
        %899 = vmatpush1.msra.mxu0 0.0
        %900 = vmatprep.subr.mxu0 0.0
        %901 = vmatpush1.msra.mxu0 0.0
        %902 = vmatprep.subr.mxu0 0.0
        %903 = vmatpush1.msra.mxu0 0.0
        %904 = vmatprep.subr.mxu0 0.0
        %905 = vmatpush1.msra.mxu0 0.0
        %906 = vmatprep.subr.mxu0 0.0
        %907 = vmatpush1.msra.mxu0 0.0
        %908 = vmatprep.subr.mxu0 0.0
        %909 = vmatpush1.msra.mxu0 0.0
        %910 = vmatprep.subr.mxu0 0.0
        %911 = vmatpush1.msra.mxu0 0.0
        %912 = vmatprep.subr.mxu0 0.0
        %913 = vmatpush1.msra.mxu0 0.0
        %914 = vmatprep.subr.mxu0 0.0
        %915 = vmatpush1.msra.mxu0 0.0
        %916 = vmatprep.subr.mxu0 0.0
        %917 = vmatpush1.msra.mxu0 0.0
        %918 = vmatprep.subr.mxu0 0.0
        %919 = vmatpush1.msra.mxu0 0.0
        %920 = vmatprep.mubr.f32.mxu0 0.0
        %921 = vmatmul.mubr.f32.gmra.mrb[0].mxu0 %v833
        %v922 = vpop.f32.mrb[0].mxu0
        %v923 = vadd.f32 0.0, %v922
        %v924 = vpop.f32.mrb[0].mxu0
        %925 = vmatprep.mubr.f32.mxu0 0.0
        %926 = vmatmul.mubr.f32.gmra.mrb[0].mxu0 %v836
        %v927 = vpop.f32.mrb[0].mxu0
        %v928 = vadd.f32 0.0, %v927
        %v929 = vpop.f32.mrb[0].mxu0
        %930 = vmatprep.mubr.f32.mxu0 0.0
        %931 = vmatmul.mubr.f32.gmra.mrb[0].mxu0 %v839
        %v932 = vpop.f32.mrb[0].mxu0
        %v933 = vadd.f32 0.0, %v932
        %v934 = vpop.f32.mrb[0].mxu0
        %935 = vmatprep.mubr.f32.mxu0 0.0
        %936 = vmatmul.mubr.f32.gmra.mrb[0].mxu0 %v842
        %v937 = vpop.f32.mrb[0].mxu0
        %v938 = vadd.f32 0.0, %v937
        %v939 = vpop.f32.mrb[0].mxu0
        %940 = vmatprep.mubr.f32.mxu0 0.0
        %941 = vmatmul.mubr.f32.gmra.mrb[0].mxu0 %v845
        %v942 = vpop.f32.mrb[0].mxu0
        %v943 = vadd.f32 0.0, %v942
        %v944 = vpop.f32.mrb[0].mxu0
        %945 = vmatprep.mubr.f32.mxu0 0.0
        %946 = vmatmul.mubr.f32.gmra.mrb[0].mxu0 %v848
        %v947 = vpop.f32.mrb[0].mxu0
        %v948 = vadd.f32 0.0, %v947
        %v949 = vpop.f32.mrb[0].mxu0
        %950 = vmatprep.mubr.f32.mxu0 0.0
        %951 = vmatmul.mubr.f32.gmra.mrb[0].mxu0 %v851
        %v952 = vpop.f32.mrb[0].mxu0
        %v953 = vadd.f32 0.0, %v952
        %v954 = vpop.f32.mrb[0].mxu0
        %955 = vmatprep.mubr.f32.mxu0 0.0
        %956 = vmatmul.mubr.f32.gmra.mrb[0].mxu0 %v854
        %v957 = vpop.f32.mrb[0].mxu0
        %v958 = vadd.f32 0.0, %v957
        %v959 = vpop.f32.mrb[0].mxu0
        %960 = vdwg.mxu0
        %v961 = vmul.f32 %v348, %v786
        %v962 = vmul.f32 %v353, %v791
        %v963 = vmul.f32 %v358, %v796
        %v964 = vmul.f32 %v363, %v801
        %v965 = vmul.f32 %v368, %v806
        %v966 = vmul.f32 %v373, %v811
        %v967 = vmul.f32 %v378, %v816
        %v968 = vmul.f32 %v383, %v821
        %v969 = vsub.f32 %v961, %v923
        %v970 = vsub.f32 %v962, %v928
        %v971 = vsub.f32 %v963, %v933
        %v972 = vsub.f32 %v964, %v938
        %v973 = vsub.f32 %v965, %v943
        %v974 = vsub.f32 %v966, %v948
        %v975 = vsub.f32 %v967, %v953
        %v976 = vsub.f32 %v968, %v958
        %v977 = vld [vmem:[%s4] sm:$0x1]
        %v979 = vlaneseq
        %v980 = vshrl.u32 %v979, 7
        %v981 = vsub.s32 0, %v980
        %v982 = vrot.slane %v977, %v981
        %v984 = vadd.f32 %v969, %v982
        %v985 = vadd.f32 %v970, %v982
        %v986 = vadd.f32 %v971, %v982
        %v987 = vadd.f32 %v972, %v982
        %v988 = vadd.f32 %v973, %v982
        %v989 = vadd.f32 %v974, %v982
        %v990 = vadd.f32 %v975, %v982
        %v991 = vadd.f32 %v976, %v982
        %992 = vst.msk [vmem:[%s226] sm:$0xff] %vm394, %v984
        %993 = vst.msk [vmem:[%s226 + $0x8] sm:$0xff] %vm394, %v985
        %994 = vst.msk [vmem:[%s226 + $0x10] sm:$0xff] %vm394, %v986
        %995 = vst.msk [vmem:[%s226 + $0x18] sm:$0xff] %vm394, %v987
        %996 = vst.msk [vmem:[%s226 + $0x20] sm:$0xff] %vm394, %v988
        %997 = vst.msk [vmem:[%s226 + $0x28] sm:$0xff] %vm394, %v989
        %998 = vst.msk [vmem:[%s226 + $0x30] sm:$0xff] %vm394, %v990
        %999 = vst.msk [vmem:[%s226 + $0x38] sm:$0xff] %vm394, %v991
        %s1000 = sand.u32 %s134, 1
        %s1001 = sand.u32 %s134, 1
        %s1002 = smul.addr %s1001, 64
        %s1003 = scalar_lea.vmem [#allocation2], %s1002
        // Predicated region
        $region41: #{tpu_custom_call.1} parent=39 // pred_check
          %p1004 = pneg %p144
        $region42: #{tpu_custom_call.1} parent=39 // pred_check_branch
          %1006 = sbr.rel (%p1004) target = $region44
        $region43: #{tpu_custom_call.1} parent=39 // pred_region
          %s1007 = smul.u32 8, %s16
          %s1008 = ssub.s32 15, %s1007
          %p1009 = scmp.lt.s32.totalorder %s1008, 8
          %s1010 = scalar_select %p1009, %s1008, 8
          %s1011 = smul.u32 128, %s1010
          %p1012 = scmp.ne.s32.totalorder 0, %s1011
          %s1013 = smul.addr %s1007, 8
          %s1014 = scalar_lea.vmem %s5, %s1013
          // Predicated region
          $region45: #{tpu_custom_call.1} parent=43 // pred_check
            %p1015 = pneg %p1012
          $region46: #{tpu_custom_call.1} parent=43 // pred_check_branch
            %1017 = sbr.rel (%p1015) target = $region48
          $region47: #{tpu_custom_call.1} parent=43 // pred_region
            // Predicated region
            $region49: #{tpu_custom_call.1} parent=47 // pred_check
              _
            $region50: #{tpu_custom_call.1} parent=47 // pred_check_branch
              %1019 = sbr.rel (0) target = $region52
            $region51: #{tpu_custom_call.1} parent=47 // pred_region
              // Predicated region
              $region71: #{tpu_custom_call.1} parent=51 // pred_check
                _
              $region72: #{tpu_custom_call.1} parent=51 // pred_check_branch
                %1082 = sbr.rel (0) target = $region74
              $region73: #{tpu_custom_call.1} parent=51 // pred_region
                %s1083 = sshrl.u32 %s1010, 3
                // While loop
                $region75: #{tpu_custom_call.1} parent=73 // loop_pre_header
                  _
                $region76: #{tpu_custom_call.1} parent=73 // loop_header
                  %s1085 = sphi 0, %s1087
                  %p1086 = scmp.ge.s32.totalorder %s1085, %s1083
                  %s1090 = sphi 0, %s1111
                  %s1091 = sphi %s1003, %s1114
                  %s1092 = sphi %s1014, %s1115
                $region77: #{tpu_custom_call.1} parent=73 // loop_header_branch
                  %1089 = sbr.rel (%p1086) target = $region81
                $region78: #{tpu_custom_call.1} parent=73 // loop_body
                  %v1093 = vld [vmem:[%s1091] sm:$0xff]
                  %1094 = vst [vmem:[%s1092] sm:$0xff] %v1093
                  %v1095 = vld [vmem:[%s1091 + $0x8] sm:$0xff]
                  %1096 = vst [vmem:[%s1092 + $0x8] sm:$0xff] %v1095
                  %v1097 = vld [vmem:[%s1091 + $0x10] sm:$0xff]
                  %1098 = vst [vmem:[%s1092 + $0x10] sm:$0xff] %v1097
                  %v1099 = vld [vmem:[%s1091 + $0x18] sm:$0xff]
                  %1100 = vst [vmem:[%s1092 + $0x18] sm:$0xff] %v1099
                  %v1101 = vld [vmem:[%s1091 + $0x20] sm:$0xff]
                  %1102 = vst [vmem:[%s1092 + $0x20] sm:$0xff] %v1101
                  %v1103 = vld [vmem:[%s1091 + $0x28] sm:$0xff]
                  %1104 = vst [vmem:[%s1092 + $0x28] sm:$0xff] %v1103
                  %v1105 = vld [vmem:[%s1091 + $0x30] sm:$0xff]
                  %1106 = vst [vmem:[%s1092 + $0x30] sm:$0xff] %v1105
                  %v1107 = vld [vmem:[%s1091 + $0x38] sm:$0xff]
                  %1108 = vst [vmem:[%s1092 + $0x38] sm:$0xff] %v1107
                  %s1109 = sadd.s32 1, %s1090
                  %p1110 = scmp.ge.s32.totalorder %s1109, %s1083
                  %s1111 = scalar_select %p1110, 0, %s1109
                  %s1112 = smul.u32 %s1111, 64
                  %s1113 = smul.u32 %s1111, 64
                  %s1114 = scalar_lea.vmem %s1003, %s1112 [#allocation2]
                  %s1115 = scalar_lea.vmem %s1014, %s1113
                $region79: #{tpu_custom_call.1} parent=73 // loop_footer
                  %s1087 = sadd.s32 %s1085, 1
                $region80: #{tpu_custom_call.1} parent=73 // loop_footer_branch
                  %1084 = sbr.rel target = $region76
                $region81: #{tpu_custom_call.1} parent=73 // loop_exit
                  _
                %s1116 = sshrl.u32 %s1010, 3
                %s1117 = sand.u32 %s1010, 7
                %s1118 = smul.u32 %s1116, 8
                %s1119 = smul.u32 8, %s1118
                %s1120 = scalar_lea.vmem %s1003, %s1119 [#allocation2]
                %s1121 = smul.u32 8, %s1118
                %s1122 = scalar_lea.vmem %s1014, %s1121
                // While loop
                $region82: #{tpu_custom_call.1} parent=73 // loop_pre_header
                  _
                $region83: #{tpu_custom_call.1} parent=73 // loop_header
                  %s1124 = sphi 0, %s1126
                  %p1125 = scmp.ge.s32.totalorder %s1124, %s1117
                  %s1129 = sphi 0, %s1136
                  %s1130 = sphi %s1120, %s1139
                  %s1131 = sphi %s1122, %s1140
                $region84: #{tpu_custom_call.1} parent=73 // loop_header_branch
                  %1128 = sbr.rel (%p1125) target = $region88
                $region85: #{tpu_custom_call.1} parent=73 // loop_body
                  %v1132 = vld [vmem:[%s1130] sm:$0xff]
                  %1133 = vst [vmem:[%s1131] sm:$0xff] %v1132
                  %s1134 = sadd.s32 1, %s1129
                  %p1135 = scmp.ge.s32.totalorder %s1134, %s1117
                  %s1136 = scalar_select %p1135, 0, %s1134
                  %s1137 = smul.u32 %s1136, 8
                  %s1138 = smul.u32 %s1136, 8
                  %s1139 = scalar_lea.vmem %s1120, %s1137 [#allocation2]
                  %s1140 = scalar_lea.vmem %s1122, %s1138
                $region86: #{tpu_custom_call.1} parent=73 // loop_footer
                  %s1126 = sadd.s32 %s1124, 1
                $region87: #{tpu_custom_call.1} parent=73 // loop_footer_branch
                  %1123 = sbr.rel target = $region83
                $region88: #{tpu_custom_call.1} parent=73 // loop_exit
                  _
              $region74: #{tpu_custom_call.1} parent=51 // pred_fallthru
                _
              // Predicated region
              $region89: #{tpu_custom_call.1} parent=51 // pred_check
                _
              $region90: #{tpu_custom_call.1} parent=51 // pred_check_branch
                %1142 = sbr.rel target = $region92
              $region91: #{tpu_custom_call.1} parent=51 // pred_region
                _
              $region92: #{tpu_custom_call.1} parent=51 // pred_fallthru
                _
            $region52: #{tpu_custom_call.1} parent=47 // pred_fallthru
              _
            // Predicated region
            $region53: #{tpu_custom_call.1} parent=47 // pred_check
              _
            $region54: #{tpu_custom_call.1} parent=47 // pred_check_branch
              %1021 = sbr.rel target = $region56
            $region55: #{tpu_custom_call.1} parent=47 // pred_region
              %s1023 = sshrl.u32 %s1010, 3
              // While loop
              $region57: #{tpu_custom_call.1} parent=55 // loop_pre_header
                _
              $region58: #{tpu_custom_call.1} parent=55 // loop_header
                %s1025 = sphi 0, %s1027
                %p1026 = scmp.ge.s32.totalorder %s1025, %s1023
                %s1030 = sphi 0, %s1051
                %s1031 = sphi %s1003, %s1054
                %s1032 = sphi %s1014, %s1055
              $region59: #{tpu_custom_call.1} parent=55 // loop_header_branch
                %1029 = sbr.rel (%p1026) target = $region63
              $region60: #{tpu_custom_call.1} parent=55 // loop_body
                %v1033 = vld [vmem:[%s1031] sm:$0xff]
                %1034 = vst [vmem:[%s1032] sm:$0xff] %v1033
                %v1035 = vld [vmem:[%s1031 + $0x8] sm:$0xff]
                %1036 = vst [vmem:[%s1032 + $0x8] sm:$0xff] %v1035
                %v1037 = vld [vmem:[%s1031 + $0x10] sm:$0xff]
                %1038 = vst [vmem:[%s1032 + $0x10] sm:$0xff] %v1037
                %v1039 = vld [vmem:[%s1031 + $0x18] sm:$0xff]
                %1040 = vst [vmem:[%s1032 + $0x18] sm:$0xff] %v1039
                %v1041 = vld [vmem:[%s1031 + $0x20] sm:$0xff]
                %1042 = vst [vmem:[%s1032 + $0x20] sm:$0xff] %v1041
                %v1043 = vld [vmem:[%s1031 + $0x28] sm:$0xff]
                %1044 = vst [vmem:[%s1032 + $0x28] sm:$0xff] %v1043
                %v1045 = vld [vmem:[%s1031 + $0x30] sm:$0xff]
                %1046 = vst [vmem:[%s1032 + $0x30] sm:$0xff] %v1045
                %v1047 = vld [vmem:[%s1031 + $0x38] sm:$0xff]
                %1048 = vst [vmem:[%s1032 + $0x38] sm:$0xff] %v1047
                %s1049 = sadd.s32 1, %s1030
                %p1050 = scmp.ge.s32.totalorder %s1049, %s1023
                %s1051 = scalar_select %p1050, 0, %s1049
                %s1052 = smul.u32 %s1051, 64
                %s1053 = smul.u32 %s1051, 64
                %s1054 = scalar_lea.vmem %s1003, %s1052 [#allocation2]
                %s1055 = scalar_lea.vmem %s1014, %s1053
              $region61: #{tpu_custom_call.1} parent=55 // loop_footer
                %s1027 = sadd.s32 %s1025, 1
              $region62: #{tpu_custom_call.1} parent=55 // loop_footer_branch
                %1024 = sbr.rel target = $region58
              $region63: #{tpu_custom_call.1} parent=55 // loop_exit
                _
              %s1056 = sshrl.u32 %s1010, 3
              %s1057 = sand.u32 %s1010, 7
              %s1058 = smul.u32 %s1056, 8
              %s1059 = smul.u32 8, %s1058
              %s1060 = scalar_lea.vmem %s1003, %s1059 [#allocation2]
              %s1061 = smul.u32 8, %s1058
              %s1062 = scalar_lea.vmem %s1014, %s1061
              // While loop
              $region64: #{tpu_custom_call.1} parent=55 // loop_pre_header
                _
              $region65: #{tpu_custom_call.1} parent=55 // loop_header
                %s1064 = sphi 0, %s1066
                %p1065 = scmp.ge.s32.totalorder %s1064, %s1057
                %s1069 = sphi 0, %s1076
                %s1070 = sphi %s1060, %s1079
                %s1071 = sphi %s1062, %s1080
              $region66: #{tpu_custom_call.1} parent=55 // loop_header_branch
                %1068 = sbr.rel (%p1065) target = $region70
              $region67: #{tpu_custom_call.1} parent=55 // loop_body
                %v1072 = vld [vmem:[%s1070] sm:$0xff]
                %1073 = vst [vmem:[%s1071] sm:$0xff] %v1072
                %s1074 = sadd.s32 1, %s1069
                %p1075 = scmp.ge.s32.totalorder %s1074, %s1057
                %s1076 = scalar_select %p1075, 0, %s1074
                %s1077 = smul.u32 %s1076, 8
                %s1078 = smul.u32 %s1076, 8
                %s1079 = scalar_lea.vmem %s1060, %s1077 [#allocation2]
                %s1080 = scalar_lea.vmem %s1062, %s1078
              $region68: #{tpu_custom_call.1} parent=55 // loop_footer
                %s1066 = sadd.s32 %s1064, 1
              $region69: #{tpu_custom_call.1} parent=55 // loop_footer_branch
                %1063 = sbr.rel target = $region65
              $region70: #{tpu_custom_call.1} parent=55 // loop_exit
                _
            $region56: #{tpu_custom_call.1} parent=47 // pred_fallthru
              _
          $region48: #{tpu_custom_call.1} parent=43 // pred_fallthru
            _
          %1143 = vnop
        $region44: #{tpu_custom_call.1} parent=39 // pred_fallthru
          _
      $region40: #{tpu_custom_call.1} parent=5 // pred_fallthru
        _
      %p1144 = scmp.le.s32.totalorder 2, %s11
      // Predicated region
      $region93: #{tpu_custom_call.1} parent=5 // pred_check
        %p1145 = pneg %p1144
      $region94: #{tpu_custom_call.1} parent=5 // pred_check_branch
        %1147 = sbr.rel (%p1145) target = $region96
      $region95: #{tpu_custom_call.1} parent=5 // pred_region
        %s1148 = ssub.s32 %s11, 2
        // Predicated region
        $region97: #{tpu_custom_call.1} parent=95 // pred_check
          %p1149 = pneg %p150
        $region98: #{tpu_custom_call.1} parent=95 // pred_check_branch
          %1151 = sbr.rel (%p1149) target = $region100
        $region99: #{tpu_custom_call.1} parent=95 // pred_region
          %s1152 = sand.u32 %s135, 1
          %s1153 = sand.u32 %s135, 1
          %s1154 = smul.addr %s1153, 64
          %s1155 = scalar_lea.vmem [#allocation2], %s1154
        $region100: #{tpu_custom_call.1} parent=95 // pred_fallthru
          _
      $region96: #{tpu_custom_call.1} parent=5 // pred_fallthru
        _
    $region6: #{tpu_custom_call.1} parent=1 // loop_footer
      %s15 = sadd.s32 1, %s11
    $region7: #{tpu_custom_call.1} parent=1 // loop_footer_branch
      %10 = sbr.rel target = $region3
    $region8: #{tpu_custom_call.1} parent=1 // loop_exit
      _

</llo_original>
